<compile_context>
chip_gen: v6e
topology: v6e:2x2x1
jax: 0.10.0
libtpu: 0.0.40
codegen_flags: <defaults>
</compile_context>

<pallas_src>
import jax
import jax.numpy as jnp
from jax.experimental import pallas as pl
from jax.experimental.pallas import tpu as pltpu

NEG_SLOPE = 0.01  # nn.LeakyReLU default negative_slope


def _embeddings_kernel(xs_ref, xt_ref, wc_ref, wl_ref, o_ref):
    # xs_ref: (TILE, 3*C_in)   [x_prev | x | x_next] for a tile of B*L rows
    # xt_ref: (TILE, 3)        time features for the same rows
    # wc_ref: (3*C_in, C_pad)  fused conv weights (tap-major), lane-padded
    # wl_ref: (3, C_pad)       linear weights (transposed), lane-padded
    # o_ref : (TILE, C_pad)
    y = jnp.dot(xs_ref[...], wc_ref[...], preferred_element_type=jnp.float32)
    # LeakyReLU (f32 on the VPU)
    y = jnp.where(y > 0, y, NEG_SLOPE * y)
    # time-feature embedding: one cheap K=3 MXU push, hides under the conv drain
    t = jnp.dot(xt_ref[...], wl_ref[...], preferred_element_type=jnp.float32)
    o_ref[...] = (y + t).astype(o_ref.dtype)


def embeddings_forward(x, x_time, conv_weight, linear_weight, *, tile_rows=512):
    """
    x            : (B, L, C_in)      float32
    x_time       : (B, L, 3)         float32
    conv_weight  : (C_out, C_in, 3)  PyTorch Conv1d weight layout
    linear_weight: (C_out, 3)        PyTorch Linear weight layout
    returns      : (B, L, C_out)
    """
    B, L, C_in = x.shape
    C_out = conv_weight.shape[0]

    # --- wrapper-side prep (cheap XLA ops, keeps the kernel pure matmul) -----
    # Replicate-padded shifts along the sequence axis (per batch element).
    x_prev = jnp.concatenate([x[:, :1, :], x[:, :-1, :]], axis=1)   # tap k=0
    x_next = jnp.concatenate([x[:, 1:, :], x[:, -1:, :]], axis=1)   # tap k=2
    # Fuse the 3 taps along the channel axis -> one K=3*C_in matmul.
    x_stack = jnp.concatenate([x_prev, x, x_next], axis=-1)         # (B, L, 3*C_in)

    rows = B * L
    x_stack = x_stack.reshape(rows, 3 * C_in)
    xt = x_time.reshape(rows, 3)

    # Lane-dense output: pad C_out up to a multiple of 128.
    C_pad = pl.cdiv(C_out, 128) * 128

    # Fused conv weight: (C_out, C_in, 3) -> (3, C_in, C_out) -> (3*C_in, C_out),
    # tap-major row order matching [x_prev | x | x_next] above.
    wc = jnp.transpose(conv_weight, (2, 1, 0)).reshape(3 * C_in, C_out)
    wc = jnp.pad(wc, ((0, 0), (0, C_pad - C_out)))                  # (3*C_in, C_pad)
    wl = jnp.transpose(linear_weight, (1, 0))                       # (3, C_out)
    wl = jnp.pad(wl, ((0, 0), (0, C_pad - C_out)))                  # (3, C_pad)

    # Row tiling: multiple of 8 sublanes; big tiles for real sizes, single tile
    # for toy sizes. (At tile=512 the double-buffered working set is < 1 MiB,
    # comfortably inside v7x's 64 MiB VMEM as well as v5e/v6e.)
    if rows >= tile_rows:
        tile = tile_rows
    else:
        tile = ((rows + 7) // 8) * 8
    rows_pad = pl.cdiv(rows, tile) * tile
    if rows_pad != rows:
        x_stack = jnp.pad(x_stack, ((0, rows_pad - rows), (0, 0)))
        xt = jnp.pad(xt, ((0, rows_pad - rows), (0, 0)))

    out = pl.pallas_call(
        _embeddings_kernel,
        out_shape=jax.ShapeDtypeStruct((rows_pad, C_pad), x.dtype),
        grid_spec=pltpu.PrefetchScalarGridSpec(
            num_scalar_prefetch=0,
            grid=(rows_pad // tile,),
            in_specs=[
                pl.BlockSpec((tile, 3 * C_in), lambda i: (i, 0)),
                pl.BlockSpec((tile, 3), lambda i: (i, 0)),
                # constant index_map -> weights stay resident, no per-step re-DMA
                pl.BlockSpec((3 * C_in, C_pad), lambda i: (0, 0)),
                pl.BlockSpec((3, C_pad), lambda i: (0, 0)),
            ],
            out_specs=pl.BlockSpec((tile, C_pad), lambda i: (i, 0)),
        ),
        compiler_params=pltpu.CompilerParams(
            dimension_semantics=("parallel",)),
    )(x_stack, xt, wc, wl)

    return out[:rows, :C_out].reshape(B, L, C_out)


def embeddings_reference(x, x_time, conv_weight, linear_weight):
    """Pure-JAX reference matching PyTorch semantics (for verification)."""
    x_prev = jnp.concatenate([x[:, :1, :], x[:, :-1, :]], axis=1)
    x_next = jnp.concatenate([x[:, 1:, :], x[:, -1:, :]], axis=1)
    w = jnp.transpose(conv_weight, (2, 1, 0))  # (3, C_in, C_out)
    y = (jnp.einsum("blc,co->blo", x_prev, w[0])
         + jnp.einsum("blc,co->blo", x, w[1])
         + jnp.einsum("blc,co->blo", x_next, w[2]))
    y = jnp.where(y > 0, y, NEG_SLOPE * y)
    t = jnp.einsum("blk,ok->blo", x_time, linear_weight)
    return y + t


if __name__ == "__main__":
    B, L, C_in, C_out = 2, 16, 4, 32

    key = jax.random.PRNGKey(0)
    k1, k2, k3, k4 = jax.random.split(key, 4)

    x = jax.random.normal(k1, (B, L, C_in), dtype=jnp.float32)
    x_time = jax.random.normal(k2, (B, L, 3), dtype=jnp.float32)
    conv_weight = jax.random.normal(k3, (C_out, C_in, 3), dtype=jnp.float32) * 0.1
    linear_weight = jax.random.normal(k4, (C_out, 3), dtype=jnp.float32) * 0.1

    out = embeddings_forward(x, x_time, conv_weight, linear_weight)
    out = jax.block_until_ready(out)

    ref = embeddings_reference(x, x_time, conv_weight, linear_weight)
    assert out.shape == (B, L, C_out), out.shape
    assert jnp.allclose(out, ref, atol=1e-5, rtol=1e-5), "mismatch vs reference"

    print("KERNEL_OK")
</pallas_src>

<mosaic_0001>
module attributes {stable_mosaic.version = 11 : i64} {
  func.func @_embeddings_kernel(%arg0: i32, %arg1: memref<32x12xf32, #tpu.memory_space<vmem>>, %arg2: memref<32x3xf32, #tpu.memory_space<vmem>>, %arg3: memref<12x128xf32, #tpu.memory_space<vmem>>, %arg4: memref<3x128xf32, #tpu.memory_space<vmem>>, %arg5: memref<32x128xf32, #tpu.memory_space<vmem>>) attributes {dimension_semantics = [#tpu.dimension_semantics<parallel>], iteration_bounds = array<i64: 1>, scalar_prefetch = 0 : i64, scratch_operands = 0 : i64, tpu.core_type = #tpu.core_type<tc>, window_params = [{transform_indices = @transform_0, window_bounds = array<i64: 32, 12>}, {transform_indices = @transform_1, window_bounds = array<i64: 32, 3>}, {pipeline_mode = #tpu.pipeline_mode<synchronous>, transform_indices = @transform_2, window_bounds = array<i64: 12, 128>}, {pipeline_mode = #tpu.pipeline_mode<synchronous>, transform_indices = @transform_3, window_bounds = array<i64: 3, 128>}, {transform_indices = @transform_4, window_bounds = array<i64: 32, 128>}]} {
    %c0 = arith.constant 0 : index
    %c0_0 = arith.constant 0 : index
    %0 = vector.load %arg1[%c0, %c0_0] : memref<32x12xf32, #tpu.memory_space<vmem>>, vector<32x12xf32>
    %c0_1 = arith.constant 0 : index
    %c0_2 = arith.constant 0 : index
    %1 = vector.load %arg3[%c0_1, %c0_2] : memref<12x128xf32, #tpu.memory_space<vmem>>, vector<12x128xf32>
    %cst = arith.constant dense<0.000000e+00> : vector<32x128xf32>
    %2 = tpu.matmul %0, %1, %cst {dimension_numbers = #tpu.dot_dimension_numbers<[1], [0], [0], [1], [0, 0, 1, 1], [], []>} : vector<32x12xf32>, vector<12x128xf32>, vector<32x128xf32> -> vector<32x128xf32>
    %cst_3 = arith.constant 0.000000e+00 : f32
    %3 = vector.broadcast %cst_3 : f32 to vector<32x128xf32>
    %4 = arith.cmpf ogt, %2, %3 : vector<32x128xf32>
    %cst_4 = arith.constant 0.00999999977 : f32
    %5 = vector.broadcast %cst_4 : f32 to vector<32x128xf32>
    %6 = arith.mulf %5, %2 : vector<32x128xf32>
    %7 = arith.select %4, %2, %6 : vector<32x128xi1>, vector<32x128xf32>
    %c0_5 = arith.constant 0 : index
    %c0_6 = arith.constant 0 : index
    %8 = vector.load %arg2[%c0_5, %c0_6] : memref<32x3xf32, #tpu.memory_space<vmem>>, vector<32x3xf32>
    %c0_7 = arith.constant 0 : index
    %c0_8 = arith.constant 0 : index
    %9 = vector.load %arg4[%c0_7, %c0_8] : memref<3x128xf32, #tpu.memory_space<vmem>>, vector<3x128xf32>
    %cst_9 = arith.constant dense<0.000000e+00> : vector<32x128xf32>
    %10 = tpu.matmul %8, %9, %cst_9 {dimension_numbers = #tpu.dot_dimension_numbers<[1], [0], [0], [1], [0, 0, 1, 1], [], []>} : vector<32x3xf32>, vector<3x128xf32>, vector<32x128xf32> -> vector<32x128xf32>
    %11 = arith.addf %7, %10 : vector<32x128xf32>
    %c0_10 = arith.constant 0 : index
    %c0_11 = arith.constant 0 : index
    %12 = vector.load %arg5[%c0_10, %c0_11] : memref<32x128xf32, #tpu.memory_space<vmem>>, vector<32x128xf32>
    tpu.vector_store %arg5[%c0_10, %c0_11], %11 {strides = array<i32>} : memref<32x128xf32, #tpu.memory_space<vmem>>, vector<32x128xf32>,
    return
  }
  func.func @transform_0(%arg0: i32) -> (i32, i32) {
    %c0_i32 = arith.constant 0 : i32
    %c0_i32_0 = arith.constant 0 : i32
    return %arg0, %c0_i32 : i32, i32
  }
  func.func @transform_1(%arg0: i32) -> (i32, i32) {
    %c0_i32 = arith.constant 0 : i32
    %c0_i32_0 = arith.constant 0 : i32
    return %arg0, %c0_i32 : i32, i32
  }
  func.func @transform_2(%arg0: i32) -> (i32, i32) {
    %c0_i32 = arith.constant 0 : i32
    %c0_i32_0 = arith.constant 0 : i32
    %c0_i32_1 = arith.constant 0 : i32
    return %c0_i32, %c0_i32_0 : i32, i32
  }
  func.func @transform_3(%arg0: i32) -> (i32, i32) {
    %c0_i32 = arith.constant 0 : i32
    %c0_i32_0 = arith.constant 0 : i32
    %c0_i32_1 = arith.constant 0 : i32
    return %c0_i32, %c0_i32_0 : i32, i32
  }
  func.func @transform_4(%arg0: i32) -> (i32, i32) {
    %c0_i32 = arith.constant 0 : i32
    %c0_i32_0 = arith.constant 0 : i32
    return %arg0, %c0_i32 : i32, i32
  }
}

</mosaic_0001>

<llo_original>
// kernel: tpu_custom_call.1
$region0: #{tpu_custom_call.1}
  #allocation0 [shape = 'u32[]', space=smem, size = 0x4, offset = 0x4, fixed_abs, tag = 'smem constant byte address 0x4 - core index']
  #allocation1 [shape = 'u32[144,128]{1,0:T(1,128)}', space=vmem, size = 0x12000, scoped, tag = 'internal scratch']
  %s0 = inlined_call_operand.vmem [shape: f32[32,12], index: 0, kind: input, shape index: {}]
  %s1 = inlined_call_operand.vmem [shape: f32[32,3], index: 1, kind: input, shape index: {}]
  %s2 = inlined_call_operand.vmem [shape: f32[12,128], index: 2, kind: input, shape index: {}]
  %s3 = inlined_call_operand.vmem [shape: f32[3,128], index: 3, kind: input, shape index: {}]
  %s4 = inlined_call_operand.hbm [shape: f32[32,128], index: 4, kind: output, shape index: {}]
  %s5 = sld [smem:[#allocation0]]
  $region26: #{tpu_custom_call.1} parent=0
    _
  %s7 = ssub.s32 1, %s5
  %s8 = scalar_select 0, %s7, %s5
  $region1: #{tpu_custom_call.1} parent=0
    #allocation2 [shape = 'u8[16384]{0}', space=vmem, size = 0x4000, scoped, tag = 'output window, operand 0, single buffered']
    #allocation3 [shape = 's32[1]{0}', space=sflag, size = 0x4, scoped, tag = 'scoped memory for tpu_custom_call.1']
    %9 = vsyncpa [#allocation3], 0
    // Predicated region
    $region2: #{tpu_custom_call.1} parent=1 // pred_check
      _
    $region3: #{tpu_custom_call.1} parent=1 // pred_check_branch
      %11 = sbr.rel (0) target = $region5
    $region4: #{tpu_custom_call.1} parent=1 // pred_region
      _
    $region5: #{tpu_custom_call.1} parent=1 // pred_fallthru
      _
    // Predicated region
    $region6: #{tpu_custom_call.1} parent=1 // pred_check
      _
    $region7: #{tpu_custom_call.1} parent=1 // pred_check_branch
      %13 = sbr.rel (0) target = $region9
    $region8: #{tpu_custom_call.1} parent=1 // pred_region
      _
    $region9: #{tpu_custom_call.1} parent=1 // pred_fallthru
      _
    // Predicated region
    $region10: #{tpu_custom_call.1} parent=1 // pred_check
      _
    $region11: #{tpu_custom_call.1} parent=1 // pred_check_branch
      %15 = sbr.rel (0) target = $region13
    $region12: #{tpu_custom_call.1} parent=1 // pred_region
      _
    $region13: #{tpu_custom_call.1} parent=1 // pred_fallthru
      _
    // Predicated region
    $region14: #{tpu_custom_call.1} parent=1 // pred_check
      _
    $region15: #{tpu_custom_call.1} parent=1 // pred_check_branch
      %17 = sbr.rel (0) target = $region17
    $region16: #{tpu_custom_call.1} parent=1 // pred_region
      _
    $region17: #{tpu_custom_call.1} parent=1 // pred_fallthru
      _
    %v18 = vld [vmem:[%s0] sm:$0xff]
    %v19 = vld [vmem:[%s0 + $0x8] sm:$0xff]
    %v20 = vld [vmem:[%s0 + $0x10] sm:$0xff]
    %v21 = vld [vmem:[%s0 + $0x18] sm:$0xff]
    %v22 = vld [vmem:[%s2] sm:$0xff]
    %v23 = vld [vmem:[%s2 + $0x8] sm:$0xf]
    %vm24 = vcmask 97280
    %v26 = vsel %vm24, %v18, 0
    %v29 = vsel %vm24, %v19, 0
    %v32 = vsel %vm24, %v20, 0
    %v35 = vsel %vm24, %v21, 0
    %vm37 = vcmask 1043456
    %v39 = vsel %vm37, %v23, 0
    %41 = vmatprep.subr.mxu0 0.0
    %42 = vmatpush1.msra.mxu0 0.0
    %43 = vmatprep.subr.mxu0 0.0
    %44 = vmatpush1.msra.mxu0 0.0
    %45 = vmatprep.subr.mxu0 0.0
    %46 = vmatpush1.msra.mxu0 0.0
    %47 = vmatprep.subr.mxu0 0.0
    %48 = vmatpush1.msra.mxu0 0.0
    %49 = vmatprep.subr.mxu0 0.0
    %50 = vmatpush1.msra.mxu0 0.0
    %51 = vmatprep.subr.mxu0 0.0
    %52 = vmatpush1.msra.mxu0 0.0
    %53 = vmatprep.subr.mxu0 0.0
    %54 = vmatpush1.msra.mxu0 0.0
    %55 = vmatprep.subr.mxu0 0.0
    %56 = vmatpush1.msra.mxu0 0.0
    %57 = vmatprep.subr.mxu0 0.0
    %58 = vmatpush1.msra.mxu0 0.0
    %59 = vmatprep.subr.mxu0 0.0
    %60 = vmatpush1.msra.mxu0 0.0
    %61 = vmatprep.subr.mxu0 0.0
    %62 = vmatpush1.msra.mxu0 0.0
    %63 = vmatprep.subr.mxu0 0.0
    %64 = vmatpush1.msra.mxu0 0.0
    %65 = vmatprep.subr.mxu0 0.0
    %66 = vmatpush1.msra.mxu0 0.0
    %67 = vmatprep.subr.mxu0 0.0
    %68 = vmatpush1.msra.mxu0 0.0
    %69 = vmatprep.subr.mxu0 0.0
    %70 = vmatpush1.msra.mxu0 %v39
    %71 = vmatprep.subr.mxu0 0.0
    %72 = vmatpush1.msra.mxu0 %v22
    %73 = vmatprep.subr.mxu0 0.0
    %74 = vmatpush2.msra.mxu0 0.0
    %75 = vmatprep.subr.mxu0 0.0
    %76 = vmatpush2.msra.mxu0 0.0
    %77 = vmatprep.subr.mxu0 0.0
    %78 = vmatpush2.msra.mxu0 0.0
    %79 = vmatprep.subr.mxu0 0.0
    %80 = vmatpush2.msra.mxu0 0.0
    %81 = vmatprep.subr.mxu0 0.0
    %82 = vmatpush2.msra.mxu0 0.0
    %83 = vmatprep.subr.mxu0 0.0
    %84 = vmatpush2.msra.mxu0 0.0
    %85 = vmatprep.subr.mxu0 0.0
    %86 = vmatpush2.msra.mxu0 0.0
    %87 = vmatprep.subr.mxu0 0.0
    %88 = vmatpush2.msra.mxu0 0.0
    %89 = vmatprep.subr.mxu0 0.0
    %90 = vmatpush2.msra.mxu0 0.0
    %91 = vmatprep.subr.mxu0 0.0
    %92 = vmatpush2.msra.mxu0 0.0
    %93 = vmatprep.subr.mxu0 0.0
    %94 = vmatpush2.msra.mxu0 0.0
    %95 = vmatprep.subr.mxu0 0.0
    %96 = vmatpush2.msra.mxu0 0.0
    %97 = vmatprep.subr.mxu0 0.0
    %98 = vmatpush2.msra.mxu0 0.0
    %99 = vmatprep.subr.mxu0 0.0
    %100 = vmatpush2.msra.mxu0 0.0
    %101 = vmatprep.subr.mxu0 0.0
    %102 = vmatpush2.msra.mxu0 0.0
    %103 = vmatprep.subr.mxu0 0.0
    %104 = vmatpush2.msra.mxu0 0.0
    %105 = vmatprep.mubr.f32.mxu0 0.0
    %106 = vmatmul.mubr.f32.gmra.mxu0 %v26
    %v107 = vpop.f32.mrf.mxu0
    %v108 = vadd.f32 0.0, %v107
    %v109 = vpop.f32.mrf.mxu0
    %110 = vmatprep.mubr.f32.mxu0 0.0
    %111 = vmatmul.mubr.f32.gmra.mxu0 %v29
    %v112 = vpop.f32.mrf.mxu0
    %v113 = vadd.f32 0.0, %v112
    %v114 = vpop.f32.mrf.mxu0
    %115 = vmatprep.mubr.f32.mxu0 0.0
    %116 = vmatmul.mubr.f32.gmra.mxu0 %v32
    %v117 = vpop.f32.mrf.mxu0
    %v118 = vadd.f32 0.0, %v117
    %v119 = vpop.f32.mrf.mxu0
    %120 = vmatprep.mubr.f32.mxu0 0.0
    %121 = vmatmul.mubr.f32.gmra.mxu0 %v35
    %v122 = vpop.f32.mrf.mxu0
    %v123 = vadd.f32 0.0, %v122
    %v124 = vpop.f32.mrf.mxu0
    %125 = vdwg.mxu0
    %vm126 = vcmp.gt.f32.partialorder %v108, 0.0
    %vm127 = vcmp.gt.f32.partialorder %v113, 0.0
    %vm128 = vcmp.gt.f32.partialorder %v118, 0.0
    %vm129 = vcmp.gt.f32.partialorder %v123, 0.0
    %v130 = vmul.f32 %v108, 0.01
    %v131 = vmul.f32 %v113, 0.01
    %v132 = vmul.f32 %v118, 0.01
    %v133 = vmul.f32 %v123, 0.01
    %v134 = vsel %vm126, %v108, %v130
    %v135 = vsel %vm127, %v113, %v131
    %v136 = vsel %vm128, %v118, %v132
    %v137 = vsel %vm129, %v123, %v133
    %v138 = vld [vmem:[%s1] sm:$0xff]
    %v139 = vld [vmem:[%s1 + $0x8] sm:$0xff]
    %v140 = vld [vmem:[%s1 + $0x10] sm:$0xff]
    %v141 = vld [vmem:[%s1 + $0x18] sm:$0xff]
    %v142 = vld [vmem:[%s3] sm:$0x7]
    %vm143 = vcmask 23552
    %v145 = vsel %vm143, %v138, 0
    %v148 = vsel %vm143, %v139, 0
    %v151 = vsel %vm143, %v140, 0
    %v154 = vsel %vm143, %v141, 0
    %vm156 = vcmask 1042432
    %v158 = vsel %vm156, %v142, 0
    %160 = vmatprep.subr.mxu0 0.0
    %161 = vmatpush1.msra.mxu0 0.0
    %162 = vmatprep.subr.mxu0 0.0
    %163 = vmatpush1.msra.mxu0 0.0
    %164 = vmatprep.subr.mxu0 0.0
    %165 = vmatpush1.msra.mxu0 0.0
    %166 = vmatprep.subr.mxu0 0.0
    %167 = vmatpush1.msra.mxu0 0.0
    %168 = vmatprep.subr.mxu0 0.0
    %169 = vmatpush1.msra.mxu0 0.0
    %170 = vmatprep.subr.mxu0 0.0
    %171 = vmatpush1.msra.mxu0 0.0
    %172 = vmatprep.subr.mxu0 0.0
    %173 = vmatpush1.msra.mxu0 0.0
    %174 = vmatprep.subr.mxu0 0.0
    %175 = vmatpush1.msra.mxu0 0.0
    %176 = vmatprep.subr.mxu0 0.0
    %177 = vmatpush1.msra.mxu0 0.0
    %178 = vmatprep.subr.mxu0 0.0
    %179 = vmatpush1.msra.mxu0 0.0
    %180 = vmatprep.subr.mxu0 0.0
    %181 = vmatpush1.msra.mxu0 0.0
    %182 = vmatprep.subr.mxu0 0.0
    %183 = vmatpush1.msra.mxu0 0.0
    %184 = vmatprep.subr.mxu0 0.0
    %185 = vmatpush1.msra.mxu0 0.0
    %186 = vmatprep.subr.mxu0 0.0
    %187 = vmatpush1.msra.mxu0 0.0
    %188 = vmatprep.subr.mxu0 0.0
    %189 = vmatpush1.msra.mxu0 0.0
    %190 = vmatprep.subr.mxu0 0.0
    %191 = vmatpush1.msra.mxu0 %v158
    %192 = vmatprep.subr.mxu0 0.0
    %193 = vmatpush2.msra.mxu0 0.0
    %194 = vmatprep.subr.mxu0 0.0
    %195 = vmatpush2.msra.mxu0 0.0
    %196 = vmatprep.subr.mxu0 0.0
    %197 = vmatpush2.msra.mxu0 0.0
    %198 = vmatprep.subr.mxu0 0.0
    %199 = vmatpush2.msra.mxu0 0.0
    %200 = vmatprep.subr.mxu0 0.0
    %201 = vmatpush2.msra.mxu0 0.0
    %202 = vmatprep.subr.mxu0 0.0
    %203 = vmatpush2.msra.mxu0 0.0
    %204 = vmatprep.subr.mxu0 0.0
    %205 = vmatpush2.msra.mxu0 0.0
    %206 = vmatprep.subr.mxu0 0.0
    %207 = vmatpush2.msra.mxu0 0.0
    %208 = vmatprep.subr.mxu0 0.0
    %209 = vmatpush2.msra.mxu0 0.0
    %210 = vmatprep.subr.mxu0 0.0
    %211 = vmatpush2.msra.mxu0 0.0
    %212 = vmatprep.subr.mxu0 0.0
    %213 = vmatpush2.msra.mxu0 0.0
    %214 = vmatprep.subr.mxu0 0.0
    %215 = vmatpush2.msra.mxu0 0.0
    %216 = vmatprep.subr.mxu0 0.0
    %217 = vmatpush2.msra.mxu0 0.0
    %218 = vmatprep.subr.mxu0 0.0
    %219 = vmatpush2.msra.mxu0 0.0
    %220 = vmatprep.subr.mxu0 0.0
    %221 = vmatpush2.msra.mxu0 0.0
    %222 = vmatprep.subr.mxu0 0.0
    %223 = vmatpush2.msra.mxu0 0.0
    %224 = vmatprep.mubr.f32.mxu0 0.0
    %225 = vmatmul.mubr.f32.gmra.mxu0 %v145
    %v226 = vpop.f32.mrf.mxu0
    %v227 = vadd.f32 0.0, %v226
    %v228 = vpop.f32.mrf.mxu0
    %229 = vmatprep.mubr.f32.mxu0 0.0
    %230 = vmatmul.mubr.f32.gmra.mxu0 %v148
    %v231 = vpop.f32.mrf.mxu0
    %v232 = vadd.f32 0.0, %v231
    %v233 = vpop.f32.mrf.mxu0
    %234 = vmatprep.mubr.f32.mxu0 0.0
    %235 = vmatmul.mubr.f32.gmra.mxu0 %v151
    %v236 = vpop.f32.mrf.mxu0
    %v237 = vadd.f32 0.0, %v236
    %v238 = vpop.f32.mrf.mxu0
    %239 = vmatprep.mubr.f32.mxu0 0.0
    %240 = vmatmul.mubr.f32.gmra.mxu0 %v154
    %v241 = vpop.f32.mrf.mxu0
    %v242 = vadd.f32 0.0, %v241
    %v243 = vpop.f32.mrf.mxu0
    %244 = vdwg.mxu0
    %v245 = vadd.f32 %v134, %v227
    %v246 = vadd.f32 %v135, %v232
    %v247 = vadd.f32 %v136, %v237
    %v248 = vadd.f32 %v137, %v242
    %249 = vst [vmem:[#allocation2] sm:$0xff] %v245
    %250 = vst [vmem:[#allocation2 + $0x8] sm:$0xff] %v246
    %251 = vst [vmem:[#allocation2 + $0x10] sm:$0xff] %v247
    %252 = vst [vmem:[#allocation2 + $0x18] sm:$0xff] %v248
    // Predicated region
    $region18: #{tpu_custom_call.1} parent=1 // pred_check
      _
    $region19: #{tpu_custom_call.1} parent=1 // pred_check_branch
      %254 = sbr.rel (0) target = $region21
    $region20: #{tpu_custom_call.1} parent=1 // pred_region
      %s256 = ssub.s32 512, 512
      %257 = vsyncadd [#allocation3], %s256
      %s258 = sshll.u32 [#allocation2], 4
      %s259 = int_to_ptr.vmem [resolvable:$true] %s258
      %264 = dma.vmem_to_hbm [thread:$0]  %s259, 512, %s4, [#allocation3], 128, 128, 8
    $region21: #{tpu_custom_call.1} parent=1 // pred_fallthru
      _
    // Predicated region
    $region22: #{tpu_custom_call.1} parent=1 // pred_check
      _
    $region23: #{tpu_custom_call.1} parent=1 // pred_check_branch
      %266 = sbr.rel (0) target = $region25
    $region24: #{tpu_custom_call.1} parent=1 // pred_region
      %267 = dma.done [#allocation3], 512
    $region25: #{tpu_custom_call.1} parent=1 // pred_fallthru
      _
    %268 = vsyncpa [#allocation3], 1

</llo_original>
